<compile_context>
chip_gen: v7x
topology: tpu7x:2x2x1
jax: 0.10.0
libtpu: 0.0.40
codegen_flags: <defaults>
</compile_context>

<pallas_src>
import math

import jax
import jax.numpy as jnp
from jax.experimental import pallas as pl
from jax.experimental.pallas import tpu as pltpu

_LANE = 128
_SUBLANE = 8
# Explicit scoped-VMEM limit: covers 2x the output tile (double-buffered) plus
# slack; above v5e's 16 MiB default, well under v7x's 64 MiB physical VMEM.
_VMEM_LIMIT_BYTES = 32 * 1024 * 1024


# ----------------------------------------------------------------------------
# Broadcast kernel: one resident mean row -> (tb, n_pad) output tile.
# ----------------------------------------------------------------------------
def _broadcast_grad_kernel(mean_ref, grad_ref):
    # mean_ref: (1, n_pad) whole array, VMEM resident (DMA'd once before grid).
    # grad_ref: (tb, n_pad) lane-dense tile; the sublane-replicate fill through
    # the vst slot is far cheaper than the HBM writeback it feeds, so the
    # kernel is bound purely by HBM write bandwidth + per-step overhead.
    grad_ref[...] = jnp.broadcast_to(mean_ref[...], grad_ref.shape)


def _choose_batch_tile(batch, row_bytes, vmem_tile_budget):
    """Largest batch tile whose double-buffered output (2x tile) stays within
    the explicit vmem_limit_bytes on every generation (incl. v7x's 64 MiB)."""
    tb = max(1, vmem_tile_budget // max(1, row_bytes))
    if tb >= batch:
        return batch                           # block == full batch dim (legal)
    # Partial-batch blocks must keep the sublane dim a multiple of 8.
    return min(batch, max(_SUBLANE, (tb // _SUBLANE) * _SUBLANE))


def empty_grad(normal_mean, batch_size, *, vmem_tile_budget=8 * 1024 * 1024):
    """grad = broadcast(normal_mean) materialized as (B, C, H, W)."""
    C, H, W = normal_mean.shape
    n = C * H * W
    mean_flat = normal_mean.reshape(1, n)            # row-major NCHW flatten

    # Keep the writeback lane-dense: pad the feature dim up to a multiple of
    # 128 and slice afterwards (no-op for input_size multiples of 16, e.g.
    # the module defaults 16 / 32).
    n_pad = ((n + _LANE - 1) // _LANE) * _LANE
    if n_pad != n:
        mean_flat = jnp.pad(mean_flat, ((0, 0), (0, n_pad - n)))

    row_bytes = n_pad * normal_mean.dtype.itemsize
    tb = _choose_batch_tile(batch_size, row_bytes, vmem_tile_budget)
    grid = (pl.cdiv(batch_size, tb),)

    grad_flat = pl.pallas_call(
        _broadcast_grad_kernel,
        out_shape=jax.ShapeDtypeStruct((batch_size, n_pad), normal_mean.dtype),
        grid=grid,
        in_specs=[pl.BlockSpec(memory_space=pltpu.VMEM)],   # whole mean row resident
        out_specs=pl.BlockSpec((tb, n_pad), lambda b: (b, 0)),
        compiler_params=pltpu.CompilerParams(
            # Batch tiles are fully independent -> shard across both TCs (v7x).
            dimension_semantics=("parallel",),
            vmem_limit_bytes=_VMEM_LIMIT_BYTES,
        ),
    )(mean_flat)

    if n_pad != n:
        grad_flat = grad_flat[:, :n]
    return grad_flat.reshape(batch_size, C, H, W)


# ----------------------------------------------------------------------------
# Module equivalent
# ----------------------------------------------------------------------------
class EmptyPallas:
    def __init__(self, input_size=32, init_std=1 / 32.0):
        self.init_std = init_std
        self.mean_shape = (3, input_size, input_size)
        # Deterministic parameter init (matches torch __init__):
        #   normal_mean   = zeros(3, input_size, input_size)
        #   normal_logstd = log(init_std) * ones(1)
        self.normal_mean = jnp.zeros(self.mean_shape, dtype=jnp.float32)
        self.normal_logstd = jnp.full((1,), math.log(self.init_std), dtype=jnp.float32)
        # TODO(synk): whiten_func in the torch module is `lambda t: 1/0` (always
        # raises); intentionally not reproduced.

    def forward(self, adv_image, image, label, target, output_fields):
        output = {}
        if "grad" in output_fields:
            output["grad"] = empty_grad(self.normal_mean, adv_image.shape[0])
        if "std" in output_fields:
            # A 1-element exp as a Pallas launch is pure overhead; compute
            # inline (also keeps the grad kernel free of the pl.when gate so
            # its grid axis can be "parallel").
            output["std"] = jnp.exp(self.normal_logstd)
        return output

    def rescale(self, scale):
        self.normal_mean = self.normal_mean * scale


if __name__ == "__main__":
    key = jax.random.PRNGKey(0)
    k1, k2, k3 = jax.random.split(key, 3)

    batch, input_size = 2, 16  # small shapes consistent with the module
    model = EmptyPallas(input_size=input_size)

    adv_image = jax.random.normal(k1, (batch, 3, input_size, input_size), jnp.float32)
    image = jax.random.normal(k2, (batch, 3, input_size, input_size), jnp.float32)
    label = jnp.zeros((batch,), jnp.int32)
    target = jnp.ones((batch,), jnp.int32)

    # default (zero) mean
    out = model.forward(adv_image, image, label, target, ["grad", "std"])
    jax.block_until_ready(out)
    assert out["grad"].shape == (batch, 3, input_size, input_size)
    assert jnp.allclose(
        out["grad"], jnp.broadcast_to(model.normal_mean, out["grad"].shape)
    )
    assert jnp.allclose(out["std"], jnp.full((1,), model.init_std), atol=1e-6)

    # non-trivial mean exercises the broadcast for real
    model.normal_mean = jax.random.normal(k3, model.mean_shape, jnp.float32)
    out2 = model.forward(adv_image, image, label, target, ["grad"])
    jax.block_until_ready(out2)
    assert jnp.allclose(
        out2["grad"],
        jnp.broadcast_to(
            model.normal_mean.reshape(1, *model.mean_shape), out2["grad"].shape
        ),
    )

    # std-only path (no Pallas launch, plain jnp.exp)
    out_std = model.forward(adv_image, image, label, target, ["std"])
    jax.block_until_ready(out_std)
    assert jnp.allclose(out_std["std"], jnp.full((1,), model.init_std), atol=1e-6)

    print("KERNEL_OK")
</pallas_src>

<mosaic_0001>
module attributes {stable_mosaic.version = 11 : i64} {
  func.func @_broadcast_grad_kernel(%arg0: i32, %arg1: memref<1x768xf32, #tpu.memory_space<vmem>>, %arg2: memref<2x768xf32, #tpu.memory_space<vmem>>) attributes {dimension_semantics = [#tpu.dimension_semantics<parallel>], iteration_bounds = array<i64: 1>, scalar_prefetch = 0 : i64, scratch_operands = 0 : i64, tpu.core_type = #tpu.core_type<tc>, window_params = [{pipeline_mode = #tpu.pipeline_mode<synchronous>, transform_indices = @transform_0, window_bounds = array<i64: 1, 768>}, {transform_indices = @transform_1, window_bounds = array<i64: 2, 768>}]} {
    %c0 = arith.constant 0 : index
    %c0_0 = arith.constant 0 : index
    %0 = vector.load %arg1[%c0, %c0_0] : memref<1x768xf32, #tpu.memory_space<vmem>>, vector<1x768xf32>
    %1 = vector.shape_cast %0 : vector<1x768xf32> to vector<1x768xf32>
    %2 = vector.broadcast %1 : vector<1x768xf32> to vector<2x768xf32>
    %c0_1 = arith.constant 0 : index
    %c0_2 = arith.constant 0 : index
    %3 = vector.load %arg2[%c0_1, %c0_2] : memref<2x768xf32, #tpu.memory_space<vmem>>, vector<2x768xf32>
    tpu.vector_store %arg2[%c0_1, %c0_2], %2 {strides = array<i32>} : memref<2x768xf32, #tpu.memory_space<vmem>>, vector<2x768xf32>,
    return
  }
  func.func @transform_0(%arg0: i32) -> (i32, i32) {
    %c0_i32 = arith.constant 0 : i32
    %c0_i32_0 = arith.constant 0 : i32
    %c0_i32_1 = arith.constant 0 : i32
    return %c0_i32, %c0_i32_0 : i32, i32
  }
  func.func @transform_1(%arg0: i32) -> (i32, i32) {
    %c0_i32 = arith.constant 0 : i32
    %c0_i32_0 = arith.constant 0 : i32
    return %arg0, %c0_i32 : i32, i32
  }
}

</mosaic_0001>

<llo_original>
// kernel: tpu_custom_call.1
$region0: #{tpu_custom_call.1}
  #allocation0 [shape = 'u32[]', space=smem, size = 0x4, offset = 0x4, fixed_abs, tag = 'smem constant byte address 0x4 - core index']
  #allocation1 [shape = 'u32[144,128]{1,0:T(1,128)}', space=vmem, size = 0x12000, scoped, tag = 'internal scratch']
  %s0 = inlined_call_operand.hbm [shape: f32[1,768], index: 0, kind: input, shape index: {}]
  %s1 = inlined_call_operand.hbm [shape: f32[2,768], index: 1, kind: output, shape index: {}]
  %s2 = sld [smem:[#allocation0]]
  $region18: #{tpu_custom_call.1} parent=0
    _
  %s4 = ssub.s32 1, %s2
  %s5 = scalar_select 0, %s4, %s2
  $region1: #{tpu_custom_call.1} parent=0
    #allocation2 [shape = 'u8[3072]{0}', space=vmem, size = 0xc00, scoped, tag = 'input window, operand 0, single buffered']
    #allocation3 [shape = 's32[1]{0}', space=sflag, size = 0x4, scoped, tag = 'scoped memory for tpu_custom_call.1']
    #allocation4 [shape = 's32[1]{0}', space=sflag, size = 0x4, scoped, tag = 'scoped memory for tpu_custom_call.1']
    #allocation5 [shape = 'u8[6144]{0}', space=vmem, size = 0x1800, scoped, tag = 'output window, operand 0, single buffered']
    %6 = vsyncpa [#allocation3], 0
    %7 = vsyncpa [#allocation4], 0
    // Predicated region
    $region2: #{tpu_custom_call.1} parent=1 // pred_check
      _
    $region3: #{tpu_custom_call.1} parent=1 // pred_check_branch
      %9 = sbr.rel (0) target = $region5
    $region4: #{tpu_custom_call.1} parent=1 // pred_region
      %s11 = ssub.s32 96, 96
      %12 = vsyncadd [#allocation3], %s11
      %s14 = sshll.u32 [#allocation2], 4
      %s15 = int_to_ptr.vmem [resolvable:$true] %s14
      %17 = dma.hbm_to_vmem [thread:$0]  %s0, 96, %s15, [#allocation3]
    $region5: #{tpu_custom_call.1} parent=1 // pred_fallthru
      _
    // Predicated region
    $region6: #{tpu_custom_call.1} parent=1 // pred_check
      _
    $region7: #{tpu_custom_call.1} parent=1 // pred_check_branch
      %19 = sbr.rel (0) target = $region9
    $region8: #{tpu_custom_call.1} parent=1 // pred_region
      %20 = dma.done [#allocation3], 96
    $region9: #{tpu_custom_call.1} parent=1 // pred_fallthru
      _
    %v21 = vld [vmem:[#allocation2] sm:$0x3f]
    %v23 = vlaneseq
    %v24 = vshrl.u32 %v23, 7
    %v25 = vsub.s32 0, %v24
    %v26 = vrot.slane %v21, %v25
    %v27 = vlaneseq
    %v28 = vshrl.u32 %v27, 7
    %v29 = vsub.s32 1, %v28
    %v30 = vrot.slane %v21, %v29
    %v31 = vlaneseq
    %v32 = vshrl.u32 %v31, 7
    %v33 = vsub.s32 2, %v32
    %v34 = vrot.slane %v21, %v33
    %v35 = vlaneseq
    %v36 = vshrl.u32 %v35, 7
    %v37 = vsub.s32 3, %v36
    %v38 = vrot.slane %v21, %v37
    %v39 = vlaneseq
    %v40 = vshrl.u32 %v39, 7
    %v41 = vsub.s32 4, %v40
    %v42 = vrot.slane %v21, %v41
    %v43 = vlaneseq
    %v44 = vshrl.u32 %v43, 7
    %v45 = vsub.s32 5, %v44
    %v46 = vrot.slane %v21, %v45
    %v47 = vcombine.low %v26, %v30
    %v48 = vcombine.low %v34, %v38
    %v50 = vunpack.c.l.s4 1983009808
    %v51 = vunpack.c.0.s8 %v50
    %v52 = vlaneseq
    %v53 = vshrl.u32 %v52, 7
    %v54 = vsub.s32 %v51, %v53
    %v55 = vrot.slane %v47, %v54
    %v57 = vunpack.c.l.s4 1983009808
    %v58 = vunpack.c.0.s8 %v57
    %v59 = vlaneseq
    %v60 = vshrl.u32 %v59, 7
    %v61 = vsub.s32 %v58, %v60
    %v62 = vrot.slane %v48, %v61
    %v63 = vcombine.low %v55, %v62
    %v64 = vcombine.low %v42, %v46
    %v66 = vunpack.c.l.s4 1983009808
    %v67 = vunpack.c.0.s8 %v66
    %v68 = vlaneseq
    %v69 = vshrl.u32 %v68, 7
    %v70 = vsub.s32 %v67, %v69
    %v71 = vrot.slane %v64, %v70
    %74 = vst [vmem:[#allocation5] sm:$0xff] %v63
    %75 = vst [vmem:[#allocation5 + $0x8] sm:$0xf] %v71
    // Predicated region
    $region10: #{tpu_custom_call.1} parent=1 // pred_check
      _
    $region11: #{tpu_custom_call.1} parent=1 // pred_check_branch
      %77 = sbr.rel (0) target = $region13
    $region12: #{tpu_custom_call.1} parent=1 // pred_region
      %s79 = ssub.s32 192, 192
      %80 = vsyncadd [#allocation4], %s79
      %s82 = sshll.u32 [#allocation5], 4
      %s83 = int_to_ptr.vmem [resolvable:$true] %s82
      %85 = dma.vmem_to_hbm [thread:$0]  %s83, 192, %s1, [#allocation4]
    $region13: #{tpu_custom_call.1} parent=1 // pred_fallthru
      _
    // Predicated region
    $region14: #{tpu_custom_call.1} parent=1 // pred_check
      _
    $region15: #{tpu_custom_call.1} parent=1 // pred_check_branch
      %87 = sbr.rel (0) target = $region17
    $region16: #{tpu_custom_call.1} parent=1 // pred_region
      %88 = dma.done [#allocation4], 192
    $region17: #{tpu_custom_call.1} parent=1 // pred_fallthru
      _
    %89 = vsyncpa [#allocation3], 1
    %90 = vsyncpa [#allocation4], 1

</llo_original>
